<compile_context>
chip_gen: v5e
topology: v5e:2x2
jax: 0.10.0
libtpu: 0.0.40
codegen_flags: <defaults>
</compile_context>

<pallas_src>
import math

import jax
import jax.numpy as jnp
from jax.experimental import pallas as pl
from jax.experimental.pallas import tpu as pltpu


def _round_up(x, m):
    return ((x + m - 1) // m) * m


# -----------------------------------------------------------------------------
# Pallas kernel: (Linear -> ReLU) * (L-1) -> Linear -> Sigmoid on one row tile.
# -----------------------------------------------------------------------------
def _make_mlp_kernel(num_layers):
    def kernel(x_ref, *refs):
        # refs = (w0, b0, w1, b1, ..., w_{L-1}, b_{L-1}, out_ref)
        out_ref = refs[-1]
        h = x_ref[...].astype(jnp.float32)
        for layer in range(num_layers):
            w = refs[2 * layer][...]                          # (din, dout)
            b = refs[2 * layer + 1][...].astype(jnp.float32)  # (1, dout)
            # MXU matmul with f32 accumulation; epilogue in f32 (v5e-safe).
            h = jnp.dot(h.astype(w.dtype), w,
                        preferred_element_type=jnp.float32) + b
            if layer < num_layers - 1:
                h = jnp.maximum(h, 0.0)              # ReLU
            else:
                h = 1.0 / (1.0 + jnp.exp(-h))        # Sigmoid (EUP exp)
        out_ref[...] = h.astype(out_ref.dtype)

    return kernel


# -----------------------------------------------------------------------------
# Wrapper: row-tiled grid, VMEM-resident weights, minimal padding, un-pad.
# -----------------------------------------------------------------------------
def function_representation_forward(coordinates, weights, biases, *,
                                    tm=512, param_dtype=jnp.float32):
    """Pallas forward for FunctionRepresentation.

    Args:
      coordinates: (N, coord_dim) float32.
      weights[i]:  (out_i, in_i)   -- PyTorch nn.Linear convention.
      biases[i]:   (out_i,)
      tm:          row-tile size (multiple of 8). 512-1024 is a good range for
                   large N; automatically clamped so the grid keeps >=2 steps
                   when N allows (v7x dual-TensorCore sharding).
      param_dtype: dtype for the resident weights (f32 default; bf16 halves
                   weight bytes and runs the v6e/v7x MXU at native rate --
                   loosen test tolerance if used).
    Returns:
      features with trailing `.squeeze()` applied, float32.
    """
    num_layers = len(weights)
    n, d0 = coordinates.shape
    dims = [int(d0)] + [int(w.shape[0]) for w in weights]

    # Final output lane width: pad only to a multiple of 8 (e.g. 3 -> 8);
    # masked-store cost is per-tile and amortised once tm is large.
    out_width = max(8, _round_up(dims[-1], 8))

    # Row tile: multiple of 8, no larger than the row count, and capped so the
    # grid has at least two steps when possible (v7x megacore sharding).
    tm = max(8, (int(tm) // 8) * 8)
    tm = min(tm, _round_up(n, 8))
    if n > 8:
        tm = min(tm, _round_up(pl.cdiv(n, 2), 8))
    tm = max(8, tm)
    grid = (pl.cdiv(n, tm),)

    # Input is used as-is (no pad copy); block last dim == full array dim.
    x = coordinates.astype(jnp.float32)

    flat_inputs = [x]
    in_specs = [pl.BlockSpec((tm, d0), lambda i: (i, 0))]
    for l in range(num_layers):
        din, dout = dims[l], dims[l + 1]
        dout_eff = out_width if l == num_layers - 1 else dout
        # Pre-transpose to (in, out) so the kernel does h @ W + b
        # (identical math to F.linear). Zero padding keeps the math exact.
        w_t = weights[l].T.astype(param_dtype)              # (din, dout)
        b_p = biases[l].astype(jnp.float32).reshape(1, dout)
        if dout_eff != dout:
            w_t = jnp.pad(w_t, ((0, 0), (0, dout_eff - dout)))
            b_p = jnp.pad(b_p, ((0, 0), (0, dout_eff - dout)))
        flat_inputs += [w_t, b_p]
        # Constant index_map -> weight/bias blocks stay resident in VMEM.
        in_specs += [
            pl.BlockSpec((din, dout_eff), lambda i: (0, 0)),
            pl.BlockSpec((1, dout_eff), lambda i: (0, 0)),
        ]

    out_spec = pl.BlockSpec((tm, out_width), lambda i: (i, 0))

    # Advisory cost estimate (real, un-padded dims) for XLA's scheduler.
    flops = 2 * n * sum(dims[l] * dims[l + 1] for l in range(num_layers))
    bytes_accessed = int(
        n * d0 * 4
        + sum(int(a.size) * a.dtype.itemsize for a in flat_inputs[1:])
        + n * out_width * 4)
    cost = pl.CostEstimate(flops=flops,
                           transcendentals=n * dims[-1],
                           bytes_accessed=bytes_accessed)

    # VMEM footprint is tiny (a (tm,d0) + (tm,8) double-buffered pair plus the
    # small resident weights), far below the scoped default on every chip, so
    # no vmem_limit_bytes override is needed.
    out_padded = pl.pallas_call(
        _make_mlp_kernel(num_layers),
        out_shape=jax.ShapeDtypeStruct((n, out_width), jnp.float32),
        grid=grid,
        in_specs=in_specs,
        out_specs=out_spec,
        compiler_params=pltpu.CompilerParams(
            dimension_semantics=("parallel",)),
        cost_estimate=cost,
    )(*flat_inputs)

    out = out_padded[:, :dims[-1]]
    # TODO(synk): host-side wall-clock timing from the PyTorch forward omitted.
    return jnp.squeeze(out)


# -----------------------------------------------------------------------------
# JAX/Pallas port of the FunctionRepresentation module interface.
# -----------------------------------------------------------------------------
class FunctionRepresentationPallas:
    def __init__(self, feature_dim, layer_sizes, num_frequencies=128, key=None):
        self.feature_dim = feature_dim
        self.layer_sizes = tuple(layer_sizes)
        self.num_frequencies = num_frequencies
        if key is None:
            key = jax.random.PRNGKey(0)
        self._init_neural_net(key)

    def _init_neural_net(self, key):
        # nn.Linear default init: U(-1/sqrt(fan_in), 1/sqrt(fan_in)).
        dims = ([self.num_frequencies * 2] + list(self.layer_sizes)
                + [self.feature_dim])
        self.weights = []
        self.biases = []
        for i in range(len(dims) - 1):
            fan_in, fan_out = dims[i], dims[i + 1]
            bound = 1.0 / math.sqrt(fan_in)
            key, kw, kb = jax.random.split(key, 3)
            w = jax.random.uniform(kw, (fan_out, fan_in), jnp.float32,
                                   -bound, bound)   # (out, in) like PyTorch
            b = jax.random.uniform(kb, (fan_out,), jnp.float32, -bound, bound)
            self.weights.append(w)
            self.biases.append(b)

    def get_weight_shapes(self):
        return ([tuple(w.shape) for w in self.weights],
                [tuple(b.shape) for b in self.biases])

    def get_weights_and_biases(self):
        return list(self.weights), list(self.biases)

    def set_weights_and_biases(self, weights, biases):
        self.weights = [jnp.asarray(w) for w in weights]
        self.biases = [jnp.asarray(b) for b in biases]

    def forward(self, coordinates, weights=None, biases=None):
        if weights is None:
            weights = self.weights
        if biases is None:
            biases = self.biases
        return function_representation_forward(coordinates, weights, biases)


# -----------------------------------------------------------------------------
# Pure-JAX reference for the kernel math.
# -----------------------------------------------------------------------------
def _reference_forward(coordinates, weights, biases):
    h = coordinates
    for i, (w, b) in enumerate(zip(weights, biases)):
        h = h @ w.T + b
        if i == len(weights) - 1:
            h = jax.nn.sigmoid(h)
        else:
            h = jnp.maximum(h, 0.0)
    return jnp.squeeze(h)


if __name__ == "__main__":
    key = jax.random.PRNGKey(0)
    key, k_coords, k_params = jax.random.split(key, 3)

    # Small, forward-consistent shapes: 256 coordinates (e.g. a 16x16 image),
    # Fourier-encoding width num_frequencies*2 = 32, two hidden layers of 32,
    # RGB output.
    num_frequencies = 16
    layer_sizes = (32, 32)
    feature_dim = 3
    n_coords = 256            # tm auto-clamps to 128 -> 2 parallel grid steps

    func_rep = FunctionRepresentationPallas(
        feature_dim, layer_sizes, num_frequencies, key=k_params)

    coords = jax.random.normal(
        k_coords, (n_coords, num_frequencies * 2), jnp.float32)

    # Hypernetwork-style usage: weights/biases passed explicitly to forward().
    weights, biases = func_rep.get_weights_and_biases()

    out = func_rep.forward(coords, weights, biases)
    out = jax.block_until_ready(out)

    ref = _reference_forward(coords, weights, biases)
    assert out.shape == ref.shape == (n_coords, feature_dim)
    assert jnp.allclose(out, ref, atol=1e-4, rtol=1e-4), float(
        jnp.max(jnp.abs(out - ref)))

    # Shape bookkeeping matches the PyTorch module's get_weight_shapes().
    w_shapes, b_shapes = func_rep.get_weight_shapes()
    assert w_shapes[0] == (layer_sizes[0], num_frequencies * 2)
    assert w_shapes[-1] == (feature_dim, layer_sizes[-1])
    assert b_shapes[-1] == (feature_dim,)

    print("KERNEL_OK")
</pallas_src>

<mosaic_0001>
module attributes {stable_mosaic.version = 11 : i64} {
  func.func @kernel(%arg0: i32, %arg1: memref<128x32xf32, #tpu.memory_space<vmem>>, %arg2: memref<32x32xf32, #tpu.memory_space<vmem>>, %arg3: memref<1x32xf32, #tpu.memory_space<vmem>>, %arg4: memref<32x32xf32, #tpu.memory_space<vmem>>, %arg5: memref<1x32xf32, #tpu.memory_space<vmem>>, %arg6: memref<32x8xf32, #tpu.memory_space<vmem>>, %arg7: memref<1x8xf32, #tpu.memory_space<vmem>>, %arg8: memref<128x8xf32, #tpu.memory_space<vmem>>) attributes {dimension_semantics = [#tpu.dimension_semantics<parallel>], iteration_bounds = array<i64: 2>, scalar_prefetch = 0 : i64, scratch_operands = 0 : i64, tpu.core_type = #tpu.core_type<tc>, window_params = [{transform_indices = @transform_0, window_bounds = array<i64: 128, 32>}, {pipeline_mode = #tpu.pipeline_mode<synchronous>, transform_indices = @transform_1, window_bounds = array<i64: 32, 32>}, {pipeline_mode = #tpu.pipeline_mode<synchronous>, transform_indices = @transform_2, window_bounds = array<i64: 1, 32>}, {pipeline_mode = #tpu.pipeline_mode<synchronous>, transform_indices = @transform_3, window_bounds = array<i64: 32, 32>}, {pipeline_mode = #tpu.pipeline_mode<synchronous>, transform_indices = @transform_4, window_bounds = array<i64: 1, 32>}, {pipeline_mode = #tpu.pipeline_mode<synchronous>, transform_indices = @transform_5, window_bounds = array<i64: 32, 8>}, {pipeline_mode = #tpu.pipeline_mode<synchronous>, transform_indices = @transform_6, window_bounds = array<i64: 1, 8>}, {transform_indices = @transform_7, window_bounds = array<i64: 128, 8>}]} {
    %c0 = arith.constant 0 : index
    %c0_0 = arith.constant 0 : index
    %0 = vector.load %arg1[%c0, %c0_0] : memref<128x32xf32, #tpu.memory_space<vmem>>, vector<128x32xf32>
    %c0_1 = arith.constant 0 : index
    %c0_2 = arith.constant 0 : index
    %1 = vector.load %arg2[%c0_1, %c0_2] : memref<32x32xf32, #tpu.memory_space<vmem>>, vector<32x32xf32>
    %c0_3 = arith.constant 0 : index
    %c0_4 = arith.constant 0 : index
    %2 = vector.load %arg3[%c0_3, %c0_4] : memref<1x32xf32, #tpu.memory_space<vmem>>, vector<1x32xf32>
    %cst = arith.constant dense<0.000000e+00> : vector<128x32xf32>
    %3 = tpu.matmul %0, %1, %cst {dimension_numbers = #tpu.dot_dimension_numbers<[1], [0], [0], [1], [0, 0, 1, 1], [], []>} : vector<128x32xf32>, vector<32x32xf32>, vector<128x32xf32> -> vector<128x32xf32>
    %4 = vector.broadcast %2 : vector<1x32xf32> to vector<128x32xf32>
    %5 = arith.addf %3, %4 : vector<128x32xf32>
    %cst_5 = arith.constant 0.000000e+00 : f32
    %6 = vector.broadcast %cst_5 : f32 to vector<128x32xf32>
    %7 = arith.maximumf %5, %6 : vector<128x32xf32>
    %c0_6 = arith.constant 0 : index
    %c0_7 = arith.constant 0 : index
    %8 = vector.load %arg4[%c0_6, %c0_7] : memref<32x32xf32, #tpu.memory_space<vmem>>, vector<32x32xf32>
    %c0_8 = arith.constant 0 : index
    %c0_9 = arith.constant 0 : index
    %9 = vector.load %arg5[%c0_8, %c0_9] : memref<1x32xf32, #tpu.memory_space<vmem>>, vector<1x32xf32>
    %cst_10 = arith.constant dense<0.000000e+00> : vector<128x32xf32>
    %10 = tpu.matmul %7, %8, %cst_10 {dimension_numbers = #tpu.dot_dimension_numbers<[1], [0], [0], [1], [0, 0, 1, 1], [], []>} : vector<128x32xf32>, vector<32x32xf32>, vector<128x32xf32> -> vector<128x32xf32>
    %11 = vector.broadcast %9 : vector<1x32xf32> to vector<128x32xf32>
    %12 = arith.addf %10, %11 : vector<128x32xf32>
    %cst_11 = arith.constant 0.000000e+00 : f32
    %13 = vector.broadcast %cst_11 : f32 to vector<128x32xf32>
    %14 = arith.maximumf %12, %13 : vector<128x32xf32>
    %c0_12 = arith.constant 0 : index
    %c0_13 = arith.constant 0 : index
    %15 = vector.load %arg6[%c0_12, %c0_13] : memref<32x8xf32, #tpu.memory_space<vmem>>, vector<32x8xf32>
    %c0_14 = arith.constant 0 : index
    %c0_15 = arith.constant 0 : index
    %16 = vector.load %arg7[%c0_14, %c0_15] : memref<1x8xf32, #tpu.memory_space<vmem>>, vector<1x8xf32>
    %cst_16 = arith.constant dense<0.000000e+00> : vector<128x8xf32>
    %17 = tpu.matmul %14, %15, %cst_16 {dimension_numbers = #tpu.dot_dimension_numbers<[1], [0], [0], [1], [0, 0, 1, 1], [], []>} : vector<128x32xf32>, vector<32x8xf32>, vector<128x8xf32> -> vector<128x8xf32>
    %18 = vector.broadcast %16 : vector<1x8xf32> to vector<128x8xf32>
    %19 = arith.addf %17, %18 : vector<128x8xf32>
    %cst_17 = arith.constant 0.000000e+00 : f32
    %20 = vector.broadcast %cst_17 : f32 to vector<128x8xf32>
    %21 = arith.subf %20, %19 : vector<128x8xf32>
    %22 = math.exp %21 : vector<128x8xf32>
    %cst_18 = arith.constant 1.000000e+00 : f32
    %23 = vector.broadcast %cst_18 : f32 to vector<128x8xf32>
    %24 = arith.addf %23, %22 : vector<128x8xf32>
    %cst_19 = arith.constant 1.000000e+00 : f32
    %25 = vector.broadcast %cst_19 : f32 to vector<128x8xf32>
    %26 = arith.divf %25, %24 : vector<128x8xf32>
    %c0_20 = arith.constant 0 : index
    %c0_21 = arith.constant 0 : index
    %27 = vector.load %arg8[%c0_20, %c0_21] : memref<128x8xf32, #tpu.memory_space<vmem>>, vector<128x8xf32>
    tpu.vector_store %arg8[%c0_20, %c0_21], %26 {strides = array<i32>} : memref<128x8xf32, #tpu.memory_space<vmem>>, vector<128x8xf32>,
    return
  }
  func.func @transform_0(%arg0: i32) -> (i32, i32) {
    %c0_i32 = arith.constant 0 : i32
    %c0_i32_0 = arith.constant 0 : i32
    return %arg0, %c0_i32 : i32, i32
  }
  func.func @transform_1(%arg0: i32) -> (i32, i32) {
    %c0_i32 = arith.constant 0 : i32
    %c0_i32_0 = arith.constant 0 : i32
    %c0_i32_1 = arith.constant 0 : i32
    return %c0_i32, %c0_i32_0 : i32, i32
  }
  func.func @transform_2(%arg0: i32) -> (i32, i32) {
    %c0_i32 = arith.constant 0 : i32
    %c0_i32_0 = arith.constant 0 : i32
    %c0_i32_1 = arith.constant 0 : i32
    return %c0_i32, %c0_i32_0 : i32, i32
  }
  func.func @transform_3(%arg0: i32) -> (i32, i32) {
    %c0_i32 = arith.constant 0 : i32
    %c0_i32_0 = arith.constant 0 : i32
    %c0_i32_1 = arith.constant 0 : i32
    return %c0_i32, %c0_i32_0 : i32, i32
  }
  func.func @transform_4(%arg0: i32) -> (i32, i32) {
    %c0_i32 = arith.constant 0 : i32
    %c0_i32_0 = arith.constant 0 : i32
    %c0_i32_1 = arith.constant 0 : i32
    return %c0_i32, %c0_i32_0 : i32, i32
  }
  func.func @transform_5(%arg0: i32) -> (i32, i32) {
    %c0_i32 = arith.constant 0 : i32
    %c0_i32_0 = arith.constant 0 : i32
    %c0_i32_1 = arith.constant 0 : i32
    return %c0_i32, %c0_i32_0 : i32, i32
  }
  func.func @transform_6(%arg0: i32) -> (i32, i32) {
    %c0_i32 = arith.constant 0 : i32
    %c0_i32_0 = arith.constant 0 : i32
    %c0_i32_1 = arith.constant 0 : i32
    return %c0_i32, %c0_i32_0 : i32, i32
  }
  func.func @transform_7(%arg0: i32) -> (i32, i32) {
    %c0_i32 = arith.constant 0 : i32
    %c0_i32_0 = arith.constant 0 : i32
    return %arg0, %c0_i32 : i32, i32
  }
}

</mosaic_0001>

<llo_original>
// kernel: tpu_custom_call.1
$region0: #{tpu_custom_call.1}
  #allocation0 [shape = 'u32[]', space=smem, size = 0x4, offset = 0x4, fixed_abs, tag = 'smem constant byte address 0x4 - core index']
  #allocation1 [shape = 'u32[72,128]{1,0:T(1,128)}', space=vmem, size = 0x9000, scoped, tag = 'internal scratch']
  %s0 = inlined_call_operand.vmem [shape: f32[256,32], index: 0, kind: input, shape index: {}]
  %s1 = inlined_call_operand.vmem [shape: f32[32,32], index: 1, kind: input, shape index: {}]
  %s2 = inlined_call_operand.vmem [shape: f32[1,32], index: 2, kind: input, shape index: {}]
  %s3 = inlined_call_operand.vmem [shape: f32[32,32], index: 3, kind: input, shape index: {}]
  %s4 = inlined_call_operand.vmem [shape: f32[1,32], index: 4, kind: input, shape index: {}]
  %s5 = inlined_call_operand.vmem [shape: f32[32,8], index: 5, kind: input, shape index: {}]
  %s6 = inlined_call_operand.vmem [shape: f32[1,8], index: 6, kind: input, shape index: {}]
  %s7 = inlined_call_operand.vmem [shape: f32[256,8], index: 7, kind: output, shape index: {}]
  %s8 = sld [smem:[#allocation0]]
  $region61: #{tpu_custom_call.1} parent=0
    _
  %s10 = ssub.s32 1, %s8
  %s11 = scalar_select 0, %s10, %s8
  loop: start=0, step=1, limit=4
  $region2: #{tpu_custom_call.1} parent=0 // loop_pre_header
    _
  $region3: #{tpu_custom_call.1} parent=0 // loop_header
    %s13 = sphi 0, %s17
    %p14 = scmp.ge.s32.totalorder %s13, 4
    %s23 = sphi 0, %s25
    %s26 = sphi 0, %s23
    %s27 = sphi 0, %s26
    %s43 = sphi 0, %s27
    %s47 = sphi 0, %s47
    %s49 = sphi 0, %s47
    %s50 = sphi 0, %s49
    %s64 = sphi 0, %s50
    %s68 = sphi 0, %s68
    %s70 = sphi 0, %s68
    %s71 = sphi 0, %s70
    %s85 = sphi 0, %s71
    %s89 = sphi 0, %s89
    %s91 = sphi 0, %s89
    %s92 = sphi 0, %s91
    %s106 = sphi 0, %s92
    %s110 = sphi 0, %s110
    %s112 = sphi 0, %s110
    %s113 = sphi 0, %s112
    %s127 = sphi 0, %s113
    %s131 = sphi 0, %s131
    %s133 = sphi 0, %s131
    %s134 = sphi 0, %s133
    %s148 = sphi 0, %s134
    %s152 = sphi 0, %s152
    %s154 = sphi 0, %s152
    %s155 = sphi 0, %s154
    %s169 = sphi 0, %s155
    %s175 = sphi 0, %s177
    %s178 = sphi 0, %s175
    %s179 = sphi 0, %s178
    %s195 = sphi 0, %s179
  $region4: #{tpu_custom_call.1} parent=0 // loop_header_branch
    %16 = sbr.rel (%p14) target = $region8
  $region5: #{tpu_custom_call.1} parent=0 // loop_body
    %s18 = ssub.s32 %s13, 1
    %s19 = ssub.s32 %s13, 2
    %s20 = sadd.s32 %s13, 1
    %s21 = ssub.s32 %s13, %s20
    %p22 = scmp.eq.s32.totalorder %s21, 0
    %s24 = sadd.s32 %s23, 1
    %s25 = scalar_select %p22, %s23, %s24
    %p28 = pneg %p22
    %p29 = scmp.eq.s32.totalorder %s13, 1
    %p30 = por %p28, %p29
    %p31 = scmp.ne.s32.totalorder %s23, %s26
    %p32 = scmp.eq.s32.totalorder %s13, 0
    %p33 = por %p31, %p32
    %p34 = scmp.ne.s32.totalorder %s23, %s26
    %p35 = scmp.eq.s32.totalorder %s18, 1
    %p36 = por %p34, %p35
    %p37 = scmp.ne.s32.totalorder %s26, %s27
    %p38 = scmp.eq.s32.totalorder %s18, 0
    %p39 = por %p37, %p38
    %p40 = scmp.ne.s32.totalorder %s26, %s27
    %p41 = scmp.eq.s32.totalorder %s19, 1
    %p42 = por %p40, %p41
    %p44 = scmp.ne.s32.totalorder %s27, %s43
    %p45 = scmp.eq.s32.totalorder %s19, 0
    %p46 = por %p44, %p45
    %s48 = sadd.s32 %s47, 1
    %p51 = scmp.eq.s32.totalorder %s13, 1
    %p52 = scmp.ne.s32.totalorder %s47, %s49
    %p53 = scmp.eq.s32.totalorder %s13, 0
    %p54 = por %p52, %p53
    %p55 = scmp.ne.s32.totalorder %s47, %s49
    %p56 = scmp.eq.s32.totalorder %s18, 1
    %p57 = por %p55, %p56
    %p58 = scmp.ne.s32.totalorder %s49, %s50
    %p59 = scmp.eq.s32.totalorder %s18, 0
    %p60 = por %p58, %p59
    %p61 = scmp.ne.s32.totalorder %s49, %s50
    %p62 = scmp.eq.s32.totalorder %s19, 1
    %p63 = por %p61, %p62
    %p65 = scmp.ne.s32.totalorder %s50, %s64
    %p66 = scmp.eq.s32.totalorder %s19, 0
    %p67 = por %p65, %p66
    %s69 = sadd.s32 %s68, 1
    %p72 = scmp.eq.s32.totalorder %s13, 1
    %p73 = scmp.ne.s32.totalorder %s68, %s70
    %p74 = scmp.eq.s32.totalorder %s13, 0
    %p75 = por %p73, %p74
    %p76 = scmp.ne.s32.totalorder %s68, %s70
    %p77 = scmp.eq.s32.totalorder %s18, 1
    %p78 = por %p76, %p77
    %p79 = scmp.ne.s32.totalorder %s70, %s71
    %p80 = scmp.eq.s32.totalorder %s18, 0
    %p81 = por %p79, %p80
    %p82 = scmp.ne.s32.totalorder %s70, %s71
    %p83 = scmp.eq.s32.totalorder %s19, 1
    %p84 = por %p82, %p83
    %p86 = scmp.ne.s32.totalorder %s71, %s85
    %p87 = scmp.eq.s32.totalorder %s19, 0
    %p88 = por %p86, %p87
    %s90 = sadd.s32 %s89, 1
    %p93 = scmp.eq.s32.totalorder %s13, 1
    %p94 = scmp.ne.s32.totalorder %s89, %s91
    %p95 = scmp.eq.s32.totalorder %s13, 0
    %p96 = por %p94, %p95
    %p97 = scmp.ne.s32.totalorder %s89, %s91
    %p98 = scmp.eq.s32.totalorder %s18, 1
    %p99 = por %p97, %p98
    %p100 = scmp.ne.s32.totalorder %s91, %s92
    %p101 = scmp.eq.s32.totalorder %s18, 0
    %p102 = por %p100, %p101
    %p103 = scmp.ne.s32.totalorder %s91, %s92
    %p104 = scmp.eq.s32.totalorder %s19, 1
    %p105 = por %p103, %p104
    %p107 = scmp.ne.s32.totalorder %s92, %s106
    %p108 = scmp.eq.s32.totalorder %s19, 0
    %p109 = por %p107, %p108
    %s111 = sadd.s32 %s110, 1
    %p114 = scmp.eq.s32.totalorder %s13, 1
    %p115 = scmp.ne.s32.totalorder %s110, %s112
    %p116 = scmp.eq.s32.totalorder %s13, 0
    %p117 = por %p115, %p116
    %p118 = scmp.ne.s32.totalorder %s110, %s112
    %p119 = scmp.eq.s32.totalorder %s18, 1
    %p120 = por %p118, %p119
    %p121 = scmp.ne.s32.totalorder %s112, %s113
    %p122 = scmp.eq.s32.totalorder %s18, 0
    %p123 = por %p121, %p122
    %p124 = scmp.ne.s32.totalorder %s112, %s113
    %p125 = scmp.eq.s32.totalorder %s19, 1
    %p126 = por %p124, %p125
    %p128 = scmp.ne.s32.totalorder %s113, %s127
    %p129 = scmp.eq.s32.totalorder %s19, 0
    %p130 = por %p128, %p129
    %s132 = sadd.s32 %s131, 1
    %p135 = scmp.eq.s32.totalorder %s13, 1
    %p136 = scmp.ne.s32.totalorder %s131, %s133
    %p137 = scmp.eq.s32.totalorder %s13, 0
    %p138 = por %p136, %p137
    %p139 = scmp.ne.s32.totalorder %s131, %s133
    %p140 = scmp.eq.s32.totalorder %s18, 1
    %p141 = por %p139, %p140
    %p142 = scmp.ne.s32.totalorder %s133, %s134
    %p143 = scmp.eq.s32.totalorder %s18, 0
    %p144 = por %p142, %p143
    %p145 = scmp.ne.s32.totalorder %s133, %s134
    %p146 = scmp.eq.s32.totalorder %s19, 1
    %p147 = por %p145, %p146
    %p149 = scmp.ne.s32.totalorder %s134, %s148
    %p150 = scmp.eq.s32.totalorder %s19, 0
    %p151 = por %p149, %p150
    %s153 = sadd.s32 %s152, 1
    %p156 = scmp.eq.s32.totalorder %s13, 1
    %p157 = scmp.ne.s32.totalorder %s152, %s154
    %p158 = scmp.eq.s32.totalorder %s13, 0
    %p159 = por %p157, %p158
    %p160 = scmp.ne.s32.totalorder %s152, %s154
    %p161 = scmp.eq.s32.totalorder %s18, 1
    %p162 = por %p160, %p161
    %p163 = scmp.ne.s32.totalorder %s154, %s155
    %p164 = scmp.eq.s32.totalorder %s18, 0
    %p165 = por %p163, %p164
    %p166 = scmp.ne.s32.totalorder %s154, %s155
    %p167 = scmp.eq.s32.totalorder %s19, 1
    %p168 = por %p166, %p167
    %p170 = scmp.ne.s32.totalorder %s155, %s169
    %p171 = scmp.eq.s32.totalorder %s19, 0
    %p172 = por %p170, %p171
    %s173 = ssub.s32 %s13, %s20
    %p174 = scmp.eq.s32.totalorder %s173, 0
    %s176 = sadd.s32 %s175, 1
    %s177 = scalar_select %p174, %s175, %s176
    %p180 = pneg %p174
    %p181 = scmp.eq.s32.totalorder %s13, 1
    %p182 = por %p180, %p181
    %p183 = scmp.ne.s32.totalorder %s175, %s178
    %p184 = scmp.eq.s32.totalorder %s13, 0
    %p185 = por %p183, %p184
    %p186 = scmp.ne.s32.totalorder %s175, %s178
    %p187 = scmp.eq.s32.totalorder %s18, 1
    %p188 = por %p186, %p187
    %p189 = scmp.ne.s32.totalorder %s178, %s179
    %p190 = scmp.eq.s32.totalorder %s18, 0
    %p191 = por %p189, %p190
    %p192 = scmp.ne.s32.totalorder %s178, %s179
    %p193 = scmp.eq.s32.totalorder %s19, 1
    %p194 = por %p192, %p193
    %p196 = scmp.ne.s32.totalorder %s179, %s195
    %p197 = scmp.eq.s32.totalorder %s19, 0
    %p198 = por %p196, %p197
    %p199 = scmp.le.s32.totalorder 1, %s13
    %p200 = scmp.lt.s32.totalorder %s13, 3
    %p201 = pnand %p199, %p200
    %p202 = pneg %p201
    // Predicated region
    $region9: #{tpu_custom_call.1} parent=5 // pred_check
      _
    $region10: #{tpu_custom_call.1} parent=5 // pred_check_branch
      %204 = sbr.rel (%p201) target = $region12
    $region11: #{tpu_custom_call.1} parent=5 // pred_region
      %s205 = ssub.s32 %s13, 1
      // Predicated region
      $region13: #{tpu_custom_call.1} parent=11 // pred_check
        %p206 = pneg %p60
      $region14: #{tpu_custom_call.1} parent=11 // pred_check_branch
        %208 = sbr.rel (%p206) target = $region16
      $region15: #{tpu_custom_call.1} parent=11 // pred_region
        _
      $region16: #{tpu_custom_call.1} parent=11 // pred_fallthru
        _
      // Predicated region
      $region17: #{tpu_custom_call.1} parent=11 // pred_check
        %p209 = pneg %p81
      $region18: #{tpu_custom_call.1} parent=11 // pred_check_branch
        %211 = sbr.rel (%p209) target = $region20
      $region19: #{tpu_custom_call.1} parent=11 // pred_region
        _
      $region20: #{tpu_custom_call.1} parent=11 // pred_fallthru
        _
      // Predicated region
      $region21: #{tpu_custom_call.1} parent=11 // pred_check
        %p212 = pneg %p102
      $region22: #{tpu_custom_call.1} parent=11 // pred_check_branch
        %214 = sbr.rel (%p212) target = $region24
      $region23: #{tpu_custom_call.1} parent=11 // pred_region
        _
      $region24: #{tpu_custom_call.1} parent=11 // pred_fallthru
        _
      // Predicated region
      $region25: #{tpu_custom_call.1} parent=11 // pred_check
        %p215 = pneg %p123
      $region26: #{tpu_custom_call.1} parent=11 // pred_check_branch
        %217 = sbr.rel (%p215) target = $region28
      $region27: #{tpu_custom_call.1} parent=11 // pred_region
        _
      $region28: #{tpu_custom_call.1} parent=11 // pred_fallthru
        _
      // Predicated region
      $region29: #{tpu_custom_call.1} parent=11 // pred_check
        %p218 = pneg %p144
      $region30: #{tpu_custom_call.1} parent=11 // pred_check_branch
        %220 = sbr.rel (%p218) target = $region32
      $region31: #{tpu_custom_call.1} parent=11 // pred_region
        _
      $region32: #{tpu_custom_call.1} parent=11 // pred_fallthru
        _
      // Predicated region
      $region33: #{tpu_custom_call.1} parent=11 // pred_check
        %p221 = pneg %p165
      $region34: #{tpu_custom_call.1} parent=11 // pred_check_branch
        %223 = sbr.rel (%p221) target = $region36
      $region35: #{tpu_custom_call.1} parent=11 // pred_region
        _
      $region36: #{tpu_custom_call.1} parent=11 // pred_fallthru
        _
    $region12: #{tpu_custom_call.1} parent=5 // pred_fallthru
      _
    %p224 = scmp.lt.s32.totalorder %s13, 2
    // Predicated region
    $region37: #{tpu_custom_call.1} parent=5 // pred_check
      %p225 = pneg %p224
    $region38: #{tpu_custom_call.1} parent=5 // pred_check_branch
      %227 = sbr.rel (%p225) target = $region40
    $region39: #{tpu_custom_call.1} parent=5 // pred_region
      // Predicated region
      $region41: #{tpu_custom_call.1} parent=39 // pred_check
        %p228 = pneg %p33
      $region42: #{tpu_custom_call.1} parent=39 // pred_check_branch
        %230 = sbr.rel (%p228) target = $region44
      $region43: #{tpu_custom_call.1} parent=39 // pred_region
        %s231 = smul.u32 16, %s13
        %p232 = scmp.lt.s32.totalorder %s231, 31
        %s233 = scalar_select %p232, %s231, 31
        %s234 = smul.addr %s233, 8
        %s235 = scalar_lea.vmem %s0, %s234
        %s236 = smul.u32 16, %s13
      $region44: #{tpu_custom_call.1} parent=39 // pred_fallthru
        _
    $region40: #{tpu_custom_call.1} parent=5 // pred_fallthru
      _
    %p237 = scmp.le.s32.totalorder 1, %s13
    %p238 = scmp.lt.s32.totalorder %s13, 3
    %p239 = pnand %p237, %p238
    %p240 = pneg %p239
    // Predicated region
    $region45: #{tpu_custom_call.1} parent=5 // pred_check
      _
    $region46: #{tpu_custom_call.1} parent=5 // pred_check_branch
      %242 = sbr.rel (%p239) target = $region48
    $region47: #{tpu_custom_call.1} parent=5 // pred_region
      %s243 = ssub.s32 %s13, 1
      %s244 = smul.u32 16, %s18
      %p245 = scmp.lt.s32.totalorder %s244, 31
      %s246 = scalar_select %p245, %s244, 31
      %s247 = smul.addr %s246, 8
      %s248 = scalar_lea.vmem %s0, %s247
      %p249 = pneg %p39
      %p250 = pneg %p36
      %p251 = pneg %p60
      %p252 = pneg %p57
      %p253 = pneg %p81
      %p254 = pneg %p78
      %p255 = pneg %p102
      %p256 = pneg %p99
      %p257 = pneg %p123
      %p258 = pneg %p120
      %p259 = pneg %p144
      %p260 = pneg %p141
      %p261 = pneg %p165
      %p262 = pneg %p162
      %p263 = pneg %p191
      %p264 = pneg %p188
      %s265 = smul.u32 16, %s18
      %p266 = scmp.lt.s32.totalorder %s265, 31
      %s267 = scalar_select %p266, %s265, 31
      %s268 = smul.addr %s267, 8
      %s269 = scalar_lea.vmem %s7, %s268
      %s270 = smul.u32 16, %s18
      %p271 = scmp.lt.s32.totalorder %s270, 31
      %s272 = scalar_select %p271, %s270, 31
      %s273 = smul.addr %s272, 8
      %s274 = scalar_lea.vmem %s0, %s273
      %s275 = smul.u32 16, %s18
      %s276 = smul.u32 16, %s18
      %p277 = scmp.lt.s32.totalorder %s276, 31
      %s278 = scalar_select %p277, %s276, 31
      %s279 = smul.addr %s278, 8
      %s280 = scalar_lea.vmem %s7, %s279
      %s281 = smul.u32 16, %s18
      %v282 = vld [vmem:[%s274] sm:$0xff]
      %v283 = vld [vmem:[%s274 + $0x8] sm:$0xff]
      %v284 = vld [vmem:[%s274 + $0x10] sm:$0xff]
      %v285 = vld [vmem:[%s274 + $0x18] sm:$0xff]
      %v286 = vld [vmem:[%s274 + $0x20] sm:$0xff]
      %v287 = vld [vmem:[%s274 + $0x28] sm:$0xff]
      %v288 = vld [vmem:[%s274 + $0x30] sm:$0xff]
      %v289 = vld [vmem:[%s274 + $0x38] sm:$0xff]
      %v290 = vld [vmem:[%s274 + $0x40] sm:$0xff]
      %v291 = vld [vmem:[%s274 + $0x48] sm:$0xff]
      %v292 = vld [vmem:[%s274 + $0x50] sm:$0xff]
      %v293 = vld [vmem:[%s274 + $0x58] sm:$0xff]
      %v294 = vld [vmem:[%s274 + $0x60] sm:$0xff]
      %v295 = vld [vmem:[%s274 + $0x68] sm:$0xff]
      %v296 = vld [vmem:[%s274 + $0x70] sm:$0xff]
      %v297 = vld [vmem:[%s274 + $0x78] sm:$0xff]
      %v298 = vld [vmem:[%s1] sm:$0xff]
      %v299 = vld [vmem:[%s1 + $0x8] sm:$0xff]
      %v300 = vld [vmem:[%s1 + $0x10] sm:$0xff]
      %v301 = vld [vmem:[%s1 + $0x18] sm:$0xff]
      %v302 = vld [vmem:[%s2] sm:$0x1]
      %v304 = vperm.slane %v302, 0
      %vm306 = vcmask 261120
      %v308 = vsel %vm306, %v282, 0
      %v311 = vsel %vm306, %v283, 0
      %v314 = vsel %vm306, %v284, 0
      %v317 = vsel %vm306, %v285, 0
      %v320 = vsel %vm306, %v286, 0
      %v323 = vsel %vm306, %v287, 0
      %v326 = vsel %vm306, %v288, 0
      %v329 = vsel %vm306, %v289, 0
      %v332 = vsel %vm306, %v290, 0
      %v335 = vsel %vm306, %v291, 0
      %v338 = vsel %vm306, %v292, 0
      %v341 = vsel %vm306, %v293, 0
      %v344 = vsel %vm306, %v294, 0
      %v347 = vsel %vm306, %v295, 0
      %v350 = vsel %vm306, %v296, 0
      %v353 = vsel %vm306, %v297, 0
      %355 = vmatpush.msra.mxu0 0.0
      %356 = vmatpush.msra.mxu0 0.0
      %357 = vmatpush.msra.mxu0 0.0
      %358 = vmatpush.msra.mxu0 0.0
      %359 = vmatpush.msra.mxu0 0.0
      %360 = vmatpush.msra.mxu0 0.0
      %361 = vmatpush.msra.mxu0 0.0
      %362 = vmatpush.msra.mxu0 0.0
      %363 = vmatpush.msra.mxu0 0.0
      %364 = vmatpush.msra.mxu0 0.0
      %365 = vmatpush.msra.mxu0 0.0
      %366 = vmatpush.msra.mxu0 0.0
      %367 = vmatpush.msra.mxu0 %v301
      %368 = vmatpush.msra.mxu0 %v300
      %369 = vmatpush.msra.mxu0 %v299
      %370 = vmatpush.msra.mxu0 %v298
      %371 = vmatmul.f32.gmra.mxu0 %v308
      %v372 = vpop.f32.mrf.mxu0
      %v373 = vadd.f32 %v304, %v372
      %374 = vmatmul.f32.gmra.mxu0 %v311
      %v375 = vpop.f32.mrf.mxu0
      %v376 = vadd.f32 %v304, %v375
      %377 = vmatmul.f32.gmra.mxu0 %v314
      %v378 = vpop.f32.mrf.mxu0
      %v379 = vadd.f32 %v304, %v378
      %380 = vmatmul.f32.gmra.mxu0 %v317
      %v381 = vpop.f32.mrf.mxu0
      %v382 = vadd.f32 %v304, %v381
      %383 = vmatmul.f32.gmra.mxu0 %v320
      %v384 = vpop.f32.mrf.mxu0
      %v385 = vadd.f32 %v304, %v384
      %386 = vmatmul.f32.gmra.mxu0 %v323
      %v387 = vpop.f32.mrf.mxu0
      %v388 = vadd.f32 %v304, %v387
      %389 = vmatmul.f32.gmra.mxu0 %v326
      %v390 = vpop.f32.mrf.mxu0
      %v391 = vadd.f32 %v304, %v390
      %392 = vmatmul.f32.gmra.mxu0 %v329
      %v393 = vpop.f32.mrf.mxu0
      %v394 = vadd.f32 %v304, %v393
      %395 = vmatmul.f32.gmra.mxu0 %v332
      %v396 = vpop.f32.mrf.mxu0
      %v397 = vadd.f32 %v304, %v396
      %398 = vmatmul.f32.gmra.mxu0 %v335
      %v399 = vpop.f32.mrf.mxu0
      %v400 = vadd.f32 %v304, %v399
      %401 = vmatmul.f32.gmra.mxu0 %v338
      %v402 = vpop.f32.mrf.mxu0
      %v403 = vadd.f32 %v304, %v402
      %404 = vmatmul.f32.gmra.mxu0 %v341
      %v405 = vpop.f32.mrf.mxu0
      %v406 = vadd.f32 %v304, %v405
      %407 = vmatmul.f32.gmra.mxu0 %v344
      %v408 = vpop.f32.mrf.mxu0
      %v409 = vadd.f32 %v304, %v408
      %410 = vmatmul.f32.gmra.mxu0 %v347
      %v411 = vpop.f32.mrf.mxu0
      %v412 = vadd.f32 %v304, %v411
      %413 = vmatmul.f32.gmra.mxu0 %v350
      %v414 = vpop.f32.mrf.mxu0
      %v415 = vadd.f32 %v304, %v414
      %416 = vmatmul.f32.gmra.mxu0 %v353
      %v417 = vpop.f32.mrf.mxu0
      %v418 = vadd.f32 %v304, %v417
      %419 = vdwg.mxu0
      %v420 = vmax.f32 %v373, 0.0
      %v421 = vmax.f32 %v376, 0.0
      %v422 = vmax.f32 %v379, 0.0
      %v423 = vmax.f32 %v382, 0.0
      %v424 = vmax.f32 %v385, 0.0
      %v425 = vmax.f32 %v388, 0.0
      %v426 = vmax.f32 %v391, 0.0
      %v427 = vmax.f32 %v394, 0.0
      %v428 = vmax.f32 %v397, 0.0
      %v429 = vmax.f32 %v400, 0.0
      %v430 = vmax.f32 %v403, 0.0
      %v431 = vmax.f32 %v406, 0.0
      %v432 = vmax.f32 %v409, 0.0
      %v433 = vmax.f32 %v412, 0.0
      %v434 = vmax.f32 %v415, 0.0
      %v435 = vmax.f32 %v418, 0.0
      %v436 = vld [vmem:[%s3] sm:$0xff]
      %v437 = vld [vmem:[%s3 + $0x8] sm:$0xff]
      %v438 = vld [vmem:[%s3 + $0x10] sm:$0xff]
      %v439 = vld [vmem:[%s3 + $0x18] sm:$0xff]
      %v440 = vld [vmem:[%s4] sm:$0x1]
      %v442 = vperm.slane %v440, 0
      %v445 = vsel %vm306, %v420, 0
      %v448 = vsel %vm306, %v421, 0
      %v451 = vsel %vm306, %v422, 0
      %v454 = vsel %vm306, %v423, 0
      %v457 = vsel %vm306, %v424, 0
      %v460 = vsel %vm306, %v425, 0
      %v463 = vsel %vm306, %v426, 0
      %v466 = vsel %vm306, %v427, 0
      %v469 = vsel %vm306, %v428, 0
      %v472 = vsel %vm306, %v429, 0
      %v475 = vsel %vm306, %v430, 0
      %v478 = vsel %vm306, %v431, 0
      %v481 = vsel %vm306, %v432, 0
      %v484 = vsel %vm306, %v433, 0
      %v487 = vsel %vm306, %v434, 0
      %v490 = vsel %vm306, %v435, 0
      %492 = vmatpush.msra.mxu0 0.0
      %493 = vmatpush.msra.mxu0 0.0
      %494 = vmatpush.msra.mxu0 0.0
      %495 = vmatpush.msra.mxu0 0.0
      %496 = vmatpush.msra.mxu0 0.0
      %497 = vmatpush.msra.mxu0 0.0
      %498 = vmatpush.msra.mxu0 0.0
      %499 = vmatpush.msra.mxu0 0.0
      %500 = vmatpush.msra.mxu0 0.0
      %501 = vmatpush.msra.mxu0 0.0
      %502 = vmatpush.msra.mxu0 0.0
      %503 = vmatpush.msra.mxu0 0.0
      %504 = vmatpush.msra.mxu0 %v439
      %505 = vmatpush.msra.mxu0 %v438
      %506 = vmatpush.msra.mxu0 %v437
      %507 = vmatpush.msra.mxu0 %v436
      %508 = vmatmul.f32.gmra.mxu0 %v445
      %v509 = vpop.f32.mrf.mxu0
      %v510 = vadd.f32 %v442, %v509
      %511 = vmatmul.f32.gmra.mxu0 %v448
      %v512 = vpop.f32.mrf.mxu0
      %v513 = vadd.f32 %v442, %v512
      %514 = vmatmul.f32.gmra.mxu0 %v451
      %v515 = vpop.f32.mrf.mxu0
      %v516 = vadd.f32 %v442, %v515
      %517 = vmatmul.f32.gmra.mxu0 %v454
      %v518 = vpop.f32.mrf.mxu0
      %v519 = vadd.f32 %v442, %v518
      %520 = vmatmul.f32.gmra.mxu0 %v457
      %v521 = vpop.f32.mrf.mxu0
      %v522 = vadd.f32 %v442, %v521
      %523 = vmatmul.f32.gmra.mxu0 %v460
      %v524 = vpop.f32.mrf.mxu0
      %v525 = vadd.f32 %v442, %v524
      %526 = vmatmul.f32.gmra.mxu0 %v463
      %v527 = vpop.f32.mrf.mxu0
      %v528 = vadd.f32 %v442, %v527
      %529 = vmatmul.f32.gmra.mxu0 %v466
      %v530 = vpop.f32.mrf.mxu0
      %v531 = vadd.f32 %v442, %v530
      %532 = vmatmul.f32.gmra.mxu0 %v469
      %v533 = vpop.f32.mrf.mxu0
      %v534 = vadd.f32 %v442, %v533
      %535 = vmatmul.f32.gmra.mxu0 %v472
      %v536 = vpop.f32.mrf.mxu0
      %v537 = vadd.f32 %v442, %v536
      %538 = vmatmul.f32.gmra.mxu0 %v475
      %v539 = vpop.f32.mrf.mxu0
      %v540 = vadd.f32 %v442, %v539
      %541 = vmatmul.f32.gmra.mxu0 %v478
      %v542 = vpop.f32.mrf.mxu0
      %v543 = vadd.f32 %v442, %v542
      %544 = vmatmul.f32.gmra.mxu0 %v481
      %v545 = vpop.f32.mrf.mxu0
      %v546 = vadd.f32 %v442, %v545
      %547 = vmatmul.f32.gmra.mxu0 %v484
      %v548 = vpop.f32.mrf.mxu0
      %v549 = vadd.f32 %v442, %v548
      %550 = vmatmul.f32.gmra.mxu0 %v487
      %v551 = vpop.f32.mrf.mxu0
      %v552 = vadd.f32 %v442, %v551
      %553 = vmatmul.f32.gmra.mxu0 %v490
      %v554 = vpop.f32.mrf.mxu0
      %v555 = vadd.f32 %v442, %v554
      %556 = vdwg.mxu0
      %v557 = vmax.f32 %v510, 0.0
      %v558 = vmax.f32 %v513, 0.0
      %v559 = vmax.f32 %v516, 0.0
      %v560 = vmax.f32 %v519, 0.0
      %v561 = vmax.f32 %v522, 0.0
      %v562 = vmax.f32 %v525, 0.0
      %v563 = vmax.f32 %v528, 0.0
      %v564 = vmax.f32 %v531, 0.0
      %v565 = vmax.f32 %v534, 0.0
      %v566 = vmax.f32 %v537, 0.0
      %v567 = vmax.f32 %v540, 0.0
      %v568 = vmax.f32 %v543, 0.0
      %v569 = vmax.f32 %v546, 0.0
      %v570 = vmax.f32 %v549, 0.0
      %v571 = vmax.f32 %v552, 0.0
      %v572 = vmax.f32 %v555, 0.0
      %v573 = vld [vmem:[%s5] sm:$0xff]
      %v574 = vld [vmem:[%s5 + $0x8] sm:$0xff]
      %v575 = vld [vmem:[%s5 + $0x10] sm:$0xff]
      %v576 = vld [vmem:[%s5 + $0x18] sm:$0xff]
      %v577 = vld [vmem:[%s6] sm:$0x1]
      %v579 = vperm.slane %v577, 0
      %v582 = vsel %vm306, %v557, 0
      %v585 = vsel %vm306, %v558, 0
      %v588 = vsel %vm306, %v559, 0
      %v591 = vsel %vm306, %v560, 0
      %v594 = vsel %vm306, %v561, 0
      %v597 = vsel %vm306, %v562, 0
      %v600 = vsel %vm306, %v563, 0
      %v603 = vsel %vm306, %v564, 0
      %v606 = vsel %vm306, %v565, 0
      %v609 = vsel %vm306, %v566, 0
      %v612 = vsel %vm306, %v567, 0
      %v615 = vsel %vm306, %v568, 0
      %v618 = vsel %vm306, %v569, 0
      %v621 = vsel %vm306, %v570, 0
      %v624 = vsel %vm306, %v571, 0
      %v627 = vsel %vm306, %v572, 0
      %629 = vmatpush.msra.mxu0 0.0
      %630 = vmatpush.msra.mxu0 0.0
      %631 = vmatpush.msra.mxu0 0.0
      %632 = vmatpush.msra.mxu0 0.0
      %633 = vmatpush.msra.mxu0 0.0
      %634 = vmatpush.msra.mxu0 0.0
      %635 = vmatpush.msra.mxu0 0.0
      %636 = vmatpush.msra.mxu0 0.0
      %637 = vmatpush.msra.mxu0 0.0
      %638 = vmatpush.msra.mxu0 0.0
      %639 = vmatpush.msra.mxu0 0.0
      %640 = vmatpush.msra.mxu0 0.0
      %641 = vmatpush.msra.mxu0 %v576
      %642 = vmatpush.msra.mxu0 %v575
      %643 = vmatpush.msra.mxu0 %v574
      %644 = vmatpush.msra.mxu0 %v573
      %645 = vmatmul.f32.gmra.mxu0 %v582
      %v646 = vpop.f32.mrf.mxu0
      %v647 = vadd.f32 %v579, %v646
      %648 = vmatmul.f32.gmra.mxu0 %v585
      %v649 = vpop.f32.mrf.mxu0
      %v650 = vadd.f32 %v579, %v649
      %651 = vmatmul.f32.gmra.mxu0 %v588
      %v652 = vpop.f32.mrf.mxu0
      %v653 = vadd.f32 %v579, %v652
      %654 = vmatmul.f32.gmra.mxu0 %v591
      %v655 = vpop.f32.mrf.mxu0
      %v656 = vadd.f32 %v579, %v655
      %657 = vmatmul.f32.gmra.mxu0 %v594
      %v658 = vpop.f32.mrf.mxu0
      %v659 = vadd.f32 %v579, %v658
      %660 = vmatmul.f32.gmra.mxu0 %v597
      %v661 = vpop.f32.mrf.mxu0
      %v662 = vadd.f32 %v579, %v661
      %663 = vmatmul.f32.gmra.mxu0 %v600
      %v664 = vpop.f32.mrf.mxu0
      %v665 = vadd.f32 %v579, %v664
      %666 = vmatmul.f32.gmra.mxu0 %v603
      %v667 = vpop.f32.mrf.mxu0
      %v668 = vadd.f32 %v579, %v667
      %669 = vmatmul.f32.gmra.mxu0 %v606
      %v670 = vpop.f32.mrf.mxu0
      %v671 = vadd.f32 %v579, %v670
      %672 = vmatmul.f32.gmra.mxu0 %v609
      %v673 = vpop.f32.mrf.mxu0
      %v674 = vadd.f32 %v579, %v673
      %675 = vmatmul.f32.gmra.mxu0 %v612
      %v676 = vpop.f32.mrf.mxu0
      %v677 = vadd.f32 %v579, %v676
      %678 = vmatmul.f32.gmra.mxu0 %v615
      %v679 = vpop.f32.mrf.mxu0
      %v680 = vadd.f32 %v579, %v679
      %681 = vmatmul.f32.gmra.mxu0 %v618
      %v682 = vpop.f32.mrf.mxu0
      %v683 = vadd.f32 %v579, %v682
      %684 = vmatmul.f32.gmra.mxu0 %v621
      %v685 = vpop.f32.mrf.mxu0
      %v686 = vadd.f32 %v579, %v685
      %687 = vmatmul.f32.gmra.mxu0 %v624
      %v688 = vpop.f32.mrf.mxu0
      %v689 = vadd.f32 %v579, %v688
      %690 = vmatmul.f32.gmra.mxu0 %v627
      %v691 = vpop.f32.mrf.mxu0
      %v692 = vadd.f32 %v579, %v691
      %693 = vdwg.mxu0
      %v694 = vsub.f32 0.0, %v647
      %v695 = vsub.f32 0.0, %v650
      %v696 = vsub.f32 0.0, %v653
      %v697 = vsub.f32 0.0, %v656
      %v698 = vsub.f32 0.0, %v659
      %v699 = vsub.f32 0.0, %v662
      %v700 = vsub.f32 0.0, %v665
      %v701 = vsub.f32 0.0, %v668
      %v702 = vsub.f32 0.0, %v671
      %v703 = vsub.f32 0.0, %v674
      %v704 = vsub.f32 0.0, %v677
      %v705 = vsub.f32 0.0, %v680
      %v706 = vsub.f32 0.0, %v683
      %v707 = vsub.f32 0.0, %v686
      %v708 = vsub.f32 0.0, %v689
      %v709 = vsub.f32 0.0, %v692
      %v710 = vmul.f32 %v694, 1.442695
      %v711 = vpow.pop %v710
      %v712 = vmul.f32 %v695, 1.442695
      %v713 = vpow.pop %v712
      %v714 = vmul.f32 %v696, 1.442695
      %v715 = vpow.pop %v714
      %v716 = vmul.f32 %v697, 1.442695
      %v717 = vpow.pop %v716
      %v718 = vmul.f32 %v698, 1.442695
      %v719 = vpow.pop %v718
      %v720 = vmul.f32 %v699, 1.442695
      %v721 = vpow.pop %v720
      %v722 = vmul.f32 %v700, 1.442695
      %v723 = vpow.pop %v722
      %v724 = vmul.f32 %v701, 1.442695
      %v725 = vpow.pop %v724
      %v726 = vmul.f32 %v702, 1.442695
      %v727 = vpow.pop %v726
      %v728 = vmul.f32 %v703, 1.442695
      %v729 = vpow.pop %v728
      %v730 = vmul.f32 %v704, 1.442695
      %v731 = vpow.pop %v730
      %v732 = vmul.f32 %v705, 1.442695
      %v733 = vpow.pop %v732
      %v734 = vmul.f32 %v706, 1.442695
      %v735 = vpow.pop %v734
      %v736 = vmul.f32 %v707, 1.442695
      %v737 = vpow.pop %v736
      %v738 = vmul.f32 %v708, 1.442695
      %v739 = vpow.pop %v738
      %v740 = vmul.f32 %v709, 1.442695
      %v741 = vpow.pop %v740
      %v742 = vadd.f32 %v711, 1.0
      %v743 = vadd.f32 %v713, 1.0
      %v744 = vadd.f32 %v715, 1.0
      %v745 = vadd.f32 %v717, 1.0
      %v746 = vadd.f32 %v719, 1.0
      %v747 = vadd.f32 %v721, 1.0
      %v748 = vadd.f32 %v723, 1.0
      %v749 = vadd.f32 %v725, 1.0
      %v750 = vadd.f32 %v727, 1.0
      %v751 = vadd.f32 %v729, 1.0
      %v752 = vadd.f32 %v731, 1.0
      %v753 = vadd.f32 %v733, 1.0
      %v754 = vadd.f32 %v735, 1.0
      %v755 = vadd.f32 %v737, 1.0
      %v756 = vadd.f32 %v739, 1.0
      %v757 = vadd.f32 %v741, 1.0
      %v758 = vrcp.pop %v742
      %v759 = vmul.f32 %v742, %v758
      %v760 = vsub.f32 1.0, %v759
      %v761 = vmul.f32 %v758, %v760
      %v762 = vadd.f32 %v758, %v761
      %vm763 = vweird.f32 %v742
      %vm764 = vweird.f32 %v758
      %vm765 = vmor %vm763, %vm764
      %v766 = vsel %vm765, %v758, %v762
      %v767 = vand.u32 2147483647, %v742
      %vm768 = vcmp.eq.f32.partialorder %v767, 8.507059e+37
      %v769 = vand.u32 %v742, 2147483648
      %v770 = vor.u32 1.1754944e-38, %v769
      %v771 = vsel %vm768, %v770, %v766
      %v772 = vmul.f32 1.0, %v771
      %v773 = vrcp.pop %v743
      %v774 = vmul.f32 %v743, %v773
      %v775 = vsub.f32 1.0, %v774
      %v776 = vmul.f32 %v773, %v775
      %v777 = vadd.f32 %v773, %v776
      %vm778 = vweird.f32 %v743
      %vm779 = vweird.f32 %v773
      %vm780 = vmor %vm778, %vm779
      %v781 = vsel %vm780, %v773, %v777
      %v782 = vand.u32 2147483647, %v743
      %vm783 = vcmp.eq.f32.partialorder %v782, 8.507059e+37
      %v784 = vand.u32 %v743, 2147483648
      %v785 = vor.u32 1.1754944e-38, %v784
      %v786 = vsel %vm783, %v785, %v781
      %v787 = vmul.f32 1.0, %v786
      %v788 = vrcp.pop %v744
      %v789 = vmul.f32 %v744, %v788
      %v790 = vsub.f32 1.0, %v789
      %v791 = vmul.f32 %v788, %v790
      %v792 = vadd.f32 %v788, %v791
      %vm793 = vweird.f32 %v744
      %vm794 = vweird.f32 %v788
      %vm795 = vmor %vm793, %vm794
      %v796 = vsel %vm795, %v788, %v792
      %v797 = vand.u32 2147483647, %v744
      %vm798 = vcmp.eq.f32.partialorder %v797, 8.507059e+37
      %v799 = vand.u32 %v744, 2147483648
      %v800 = vor.u32 1.1754944e-38, %v799
      %v801 = vsel %vm798, %v800, %v796
      %v802 = vmul.f32 1.0, %v801
      %v803 = vrcp.pop %v745
      %v804 = vmul.f32 %v745, %v803
      %v805 = vsub.f32 1.0, %v804
      %v806 = vmul.f32 %v803, %v805
      %v807 = vadd.f32 %v803, %v806
      %vm808 = vweird.f32 %v745
      %vm809 = vweird.f32 %v803
      %vm810 = vmor %vm808, %vm809
      %v811 = vsel %vm810, %v803, %v807
      %v812 = vand.u32 2147483647, %v745
      %vm813 = vcmp.eq.f32.partialorder %v812, 8.507059e+37
      %v814 = vand.u32 %v745, 2147483648
      %v815 = vor.u32 1.1754944e-38, %v814
      %v816 = vsel %vm813, %v815, %v811
      %v817 = vmul.f32 1.0, %v816
      %v818 = vrcp.pop %v746
      %v819 = vmul.f32 %v746, %v818
      %v820 = vsub.f32 1.0, %v819
      %v821 = vmul.f32 %v818, %v820
      %v822 = vadd.f32 %v818, %v821
      %vm823 = vweird.f32 %v746
      %vm824 = vweird.f32 %v818
      %vm825 = vmor %vm823, %vm824
      %v826 = vsel %vm825, %v818, %v822
      %v827 = vand.u32 2147483647, %v746
      %vm828 = vcmp.eq.f32.partialorder %v827, 8.507059e+37
      %v829 = vand.u32 %v746, 2147483648
      %v830 = vor.u32 1.1754944e-38, %v829
      %v831 = vsel %vm828, %v830, %v826
      %v832 = vmul.f32 1.0, %v831
      %v833 = vrcp.pop %v747
      %v834 = vmul.f32 %v747, %v833
      %v835 = vsub.f32 1.0, %v834
      %v836 = vmul.f32 %v833, %v835
      %v837 = vadd.f32 %v833, %v836
      %vm838 = vweird.f32 %v747
      %vm839 = vweird.f32 %v833
      %vm840 = vmor %vm838, %vm839
      %v841 = vsel %vm840, %v833, %v837
      %v842 = vand.u32 2147483647, %v747
      %vm843 = vcmp.eq.f32.partialorder %v842, 8.507059e+37
      %v844 = vand.u32 %v747, 2147483648
      %v845 = vor.u32 1.1754944e-38, %v844
      %v846 = vsel %vm843, %v845, %v841
      %v847 = vmul.f32 1.0, %v846
      %v848 = vrcp.pop %v748
      %v849 = vmul.f32 %v748, %v848
      %v850 = vsub.f32 1.0, %v849
      %v851 = vmul.f32 %v848, %v850
      %v852 = vadd.f32 %v848, %v851
      %vm853 = vweird.f32 %v748
      %vm854 = vweird.f32 %v848
      %vm855 = vmor %vm853, %vm854
      %v856 = vsel %vm855, %v848, %v852
      %v857 = vand.u32 2147483647, %v748
      %vm858 = vcmp.eq.f32.partialorder %v857, 8.507059e+37
      %v859 = vand.u32 %v748, 2147483648
      %v860 = vor.u32 1.1754944e-38, %v859
      %v861 = vsel %vm858, %v860, %v856
      %v862 = vmul.f32 1.0, %v861
      %v863 = vrcp.pop %v749
      %v864 = vmul.f32 %v749, %v863
      %v865 = vsub.f32 1.0, %v864
      %v866 = vmul.f32 %v863, %v865
      %v867 = vadd.f32 %v863, %v866
      %vm868 = vweird.f32 %v749
      %vm869 = vweird.f32 %v863
      %vm870 = vmor %vm868, %vm869
      %v871 = vsel %vm870, %v863, %v867
      %v872 = vand.u32 2147483647, %v749
      %vm873 = vcmp.eq.f32.partialorder %v872, 8.507059e+37
      %v874 = vand.u32 %v749, 2147483648
      %v875 = vor.u32 1.1754944e-38, %v874
      %v876 = vsel %vm873, %v875, %v871
      %v877 = vmul.f32 1.0, %v876
      %v878 = vrcp.pop %v750
      %v879 = vmul.f32 %v750, %v878
      %v880 = vsub.f32 1.0, %v879
      %v881 = vmul.f32 %v878, %v880
      %v882 = vadd.f32 %v878, %v881
      %vm883 = vweird.f32 %v750
      %vm884 = vweird.f32 %v878
      %vm885 = vmor %vm883, %vm884
      %v886 = vsel %vm885, %v878, %v882
      %v887 = vand.u32 2147483647, %v750
      %vm888 = vcmp.eq.f32.partialorder %v887, 8.507059e+37
      %v889 = vand.u32 %v750, 2147483648
      %v890 = vor.u32 1.1754944e-38, %v889
      %v891 = vsel %vm888, %v890, %v886
      %v892 = vmul.f32 1.0, %v891
      %v893 = vrcp.pop %v751
      %v894 = vmul.f32 %v751, %v893
      %v895 = vsub.f32 1.0, %v894
      %v896 = vmul.f32 %v893, %v895
      %v897 = vadd.f32 %v893, %v896
      %vm898 = vweird.f32 %v751
      %vm899 = vweird.f32 %v893
      %vm900 = vmor %vm898, %vm899
      %v901 = vsel %vm900, %v893, %v897
      %v902 = vand.u32 2147483647, %v751
      %vm903 = vcmp.eq.f32.partialorder %v902, 8.507059e+37
      %v904 = vand.u32 %v751, 2147483648
      %v905 = vor.u32 1.1754944e-38, %v904
      %v906 = vsel %vm903, %v905, %v901
      %v907 = vmul.f32 1.0, %v906
      %v908 = vrcp.pop %v752
      %v909 = vmul.f32 %v752, %v908
      %v910 = vsub.f32 1.0, %v909
      %v911 = vmul.f32 %v908, %v910
      %v912 = vadd.f32 %v908, %v911
      %vm913 = vweird.f32 %v752
      %vm914 = vweird.f32 %v908
      %vm915 = vmor %vm913, %vm914
      %v916 = vsel %vm915, %v908, %v912
      %v917 = vand.u32 2147483647, %v752
      %vm918 = vcmp.eq.f32.partialorder %v917, 8.507059e+37
      %v919 = vand.u32 %v752, 2147483648
      %v920 = vor.u32 1.1754944e-38, %v919
      %v921 = vsel %vm918, %v920, %v916
      %v922 = vmul.f32 1.0, %v921
      %v923 = vrcp.pop %v753
      %v924 = vmul.f32 %v753, %v923
      %v925 = vsub.f32 1.0, %v924
      %v926 = vmul.f32 %v923, %v925
      %v927 = vadd.f32 %v923, %v926
      %vm928 = vweird.f32 %v753
      %vm929 = vweird.f32 %v923
      %vm930 = vmor %vm928, %vm929
      %v931 = vsel %vm930, %v923, %v927
      %v932 = vand.u32 2147483647, %v753
      %vm933 = vcmp.eq.f32.partialorder %v932, 8.507059e+37
      %v934 = vand.u32 %v753, 2147483648
      %v935 = vor.u32 1.1754944e-38, %v934
      %v936 = vsel %vm933, %v935, %v931
      %v937 = vmul.f32 1.0, %v936
      %v938 = vrcp.pop %v754
      %v939 = vmul.f32 %v754, %v938
      %v940 = vsub.f32 1.0, %v939
      %v941 = vmul.f32 %v938, %v940
      %v942 = vadd.f32 %v938, %v941
      %vm943 = vweird.f32 %v754
      %vm944 = vweird.f32 %v938
      %vm945 = vmor %vm943, %vm944
      %v946 = vsel %vm945, %v938, %v942
      %v947 = vand.u32 2147483647, %v754
      %vm948 = vcmp.eq.f32.partialorder %v947, 8.507059e+37
      %v949 = vand.u32 %v754, 2147483648
      %v950 = vor.u32 1.1754944e-38, %v949
      %v951 = vsel %vm948, %v950, %v946
      %v952 = vmul.f32 1.0, %v951
      %v953 = vrcp.pop %v755
      %v954 = vmul.f32 %v755, %v953
      %v955 = vsub.f32 1.0, %v954
      %v956 = vmul.f32 %v953, %v955
      %v957 = vadd.f32 %v953, %v956
      %vm958 = vweird.f32 %v755
      %vm959 = vweird.f32 %v953
      %vm960 = vmor %vm958, %vm959
      %v961 = vsel %vm960, %v953, %v957
      %v962 = vand.u32 2147483647, %v755
      %vm963 = vcmp.eq.f32.partialorder %v962, 8.507059e+37
      %v964 = vand.u32 %v755, 2147483648
      %v965 = vor.u32 1.1754944e-38, %v964
      %v966 = vsel %vm963, %v965, %v961
      %v967 = vmul.f32 1.0, %v966
      %v968 = vrcp.pop %v756
      %v969 = vmul.f32 %v756, %v968
      %v970 = vsub.f32 1.0, %v969
      %v971 = vmul.f32 %v968, %v970
      %v972 = vadd.f32 %v968, %v971
      %vm973 = vweird.f32 %v756
      %vm974 = vweird.f32 %v968
      %vm975 = vmor %vm973, %vm974
      %v976 = vsel %vm975, %v968, %v972
      %v977 = vand.u32 2147483647, %v756
      %vm978 = vcmp.eq.f32.partialorder %v977, 8.507059e+37
      %v979 = vand.u32 %v756, 2147483648
      %v980 = vor.u32 1.1754944e-38, %v979
      %v981 = vsel %vm978, %v980, %v976
      %v982 = vmul.f32 1.0, %v981
      %v983 = vrcp.pop %v757
      %v984 = vmul.f32 %v757, %v983
      %v985 = vsub.f32 1.0, %v984
      %v986 = vmul.f32 %v983, %v985
      %v987 = vadd.f32 %v983, %v986
      %vm988 = vweird.f32 %v757
      %vm989 = vweird.f32 %v983
      %vm990 = vmor %vm988, %vm989
      %v991 = vsel %vm990, %v983, %v987
      %v992 = vand.u32 2147483647, %v757
      %vm993 = vcmp.eq.f32.partialorder %v992, 8.507059e+37
      %v994 = vand.u32 %v757, 2147483648
      %v995 = vor.u32 1.1754944e-38, %v994
      %v996 = vsel %vm993, %v995, %v991
      %v997 = vmul.f32 1.0, %v996
      %vm998 = vcmask 64512
      %999 = vst.msk [vmem:[%s280] sm:$0xff] %vm998, %v772
      %1000 = vst.msk [vmem:[%s280 + $0x8] sm:$0xff] %vm998, %v787
      %1001 = vst.msk [vmem:[%s280 + $0x10] sm:$0xff] %vm998, %v802
      %1002 = vst.msk [vmem:[%s280 + $0x18] sm:$0xff] %vm998, %v817
      %1003 = vst.msk [vmem:[%s280 + $0x20] sm:$0xff] %vm998, %v832
      %1004 = vst.msk [vmem:[%s280 + $0x28] sm:$0xff] %vm998, %v847
      %1005 = vst.msk [vmem:[%s280 + $0x30] sm:$0xff] %vm998, %v862
      %1006 = vst.msk [vmem:[%s280 + $0x38] sm:$0xff] %vm998, %v877
      %1007 = vst.msk [vmem:[%s280 + $0x40] sm:$0xff] %vm998, %v892
      %1008 = vst.msk [vmem:[%s280 + $0x48] sm:$0xff] %vm998, %v907
      %1009 = vst.msk [vmem:[%s280 + $0x50] sm:$0xff] %vm998, %v922
      %1010 = vst.msk [vmem:[%s280 + $0x58] sm:$0xff] %vm998, %v937
      %1011 = vst.msk [vmem:[%s280 + $0x60] sm:$0xff] %vm998, %v952
      %1012 = vst.msk [vmem:[%s280 + $0x68] sm:$0xff] %vm998, %v967
      %1013 = vst.msk [vmem:[%s280 + $0x70] sm:$0xff] %vm998, %v982
      %1014 = vst.msk [vmem:[%s280 + $0x78] sm:$0xff] %vm998, %v997
      %s1015 = smul.u32 16, %s18
      %p1016 = scmp.lt.s32.totalorder %s1015, 31
      %s1017 = scalar_select %p1016, %s1015, 31
      %s1018 = smul.addr %s1017, 8
      %s1019 = scalar_lea.vmem %s7, %s1018
      // Predicated region
      $region49: #{tpu_custom_call.1} parent=47 // pred_check
        %p1020 = pneg %p188
      $region50: #{tpu_custom_call.1} parent=47 // pred_check_branch
        %1022 = sbr.rel (%p1020) target = $region52
      $region51: #{tpu_custom_call.1} parent=47 // pred_region
        %s1023 = smul.u32 16, %s18
      $region52: #{tpu_custom_call.1} parent=47 // pred_fallthru
        _
    $region48: #{tpu_custom_call.1} parent=5 // pred_fallthru
      _
    %p1024 = scmp.le.s32.totalorder 2, %s13
    // Predicated region
    $region53: #{tpu_custom_call.1} parent=5 // pred_check
      %p1025 = pneg %p1024
    $region54: #{tpu_custom_call.1} parent=5 // pred_check_branch
      %1027 = sbr.rel (%p1025) target = $region56
    $region55: #{tpu_custom_call.1} parent=5 // pred_region
      %s1028 = ssub.s32 %s13, 2
      // Predicated region
      $region57: #{tpu_custom_call.1} parent=55 // pred_check
        %p1029 = pneg %p194
      $region58: #{tpu_custom_call.1} parent=55 // pred_check_branch
        %1031 = sbr.rel (%p1029) target = $region60
      $region59: #{tpu_custom_call.1} parent=55 // pred_region
        %s1032 = smul.u32 16, %s19
        %p1033 = scmp.lt.s32.totalorder %s1032, 31
        %s1034 = scalar_select %p1033, %s1032, 31
        %s1035 = smul.addr %s1034, 8
        %s1036 = scalar_lea.vmem %s7, %s1035
      $region60: #{tpu_custom_call.1} parent=55 // pred_fallthru
        _
    $region56: #{tpu_custom_call.1} parent=5 // pred_fallthru
      _
  $region6: #{tpu_custom_call.1} parent=0 // loop_footer
    %s17 = sadd.s32 1, %s13
  $region7: #{tpu_custom_call.1} parent=0 // loop_footer_branch
    %12 = sbr.rel target = $region3
  $region8: #{tpu_custom_call.1} parent=0 // loop_exit
    _

</llo_original>
